<compile_context>
chip_gen: v6e
topology: v6e:2x2x1
jax: 0.10.0
libtpu: 0.0.40
codegen_flags: <defaults>
</compile_context>

<pallas_src>
import jax
import jax.numpy as jnp
from jax.experimental import pallas as pl
from jax.experimental.pallas import tpu as pltpu

_LANE = 128      # lane width: feature dims padded to a multiple of this
_SUBLANE = 8     # sublane count: batch padded to a multiple of this


def _round_up(n, m):
    return ((n + m - 1) // m) * m


def _pad2d(a, rows, cols):
    r, c = a.shape
    if r == rows and c == cols:
        return a
    return jnp.pad(a, ((0, rows - r), (0, cols - c)))


# ----------------------------------------------------------------------------
# Fused kernel: y = (x @ W1 + b1) @ W2 + b2   and   kl = KL(q || N(0,1))
# ----------------------------------------------------------------------------
def _fused_kernel(x_ref, w1mu_ref, w1ls_ref, b1mu_ref, b1ls_ref,
                  w2mu_ref, w2ls_ref, b2mu_ref, b2ls_ref,
                  y_ref, kl_ref):
    w1 = w1mu_ref[...]
    w2 = w2mu_ref[...]

    # Layer 1 (encoder): bf16 MXU operands, f32 accumulation; h stays on-chip.
    h = jnp.dot(x_ref[...].astype(jnp.bfloat16), w1.astype(jnp.bfloat16),
                preferred_element_type=jnp.float32) + b1mu_ref[...]
    # Layer 2 (predictor): consume h immediately; only y is written back.
    y = jnp.dot(h.astype(jnp.bfloat16), w2.astype(jnp.bfloat16),
                preferred_element_type=jnp.float32) + b2mu_ref[...]
    y_ref[...] = y

    # Parameter-only KL, independent of the batch tile: write once (step 0).
    @pl.when(pl.program_id(0) == 0)
    def _():
        def kl_sum(mu, ls):
            # KL(N(mu, exp(ls)^2) || N(0,1)), summed over all entries (f32).
            return jnp.sum(0.5 * (jnp.exp(2.0 * ls) + mu * mu - 1.0) - ls)

        kl_ref[0] = (kl_sum(w1, w1ls_ref[...])
                     + kl_sum(b1mu_ref[...], b1ls_ref[...])
                     + kl_sum(w2, w2ls_ref[...])
                     + kl_sum(b2mu_ref[...], b2ls_ref[...]))


# ----------------------------------------------------------------------------
# Parameter preparation: pad once, reuse across forwards
# ----------------------------------------------------------------------------
def prepare_params(enc_params, pred_params):
    w1_mu, w1_ls, b1_mu, b1_ls = enc_params
    w2_mu, w2_ls, b2_mu, b2_ls = pred_params
    d_in, h = w1_mu.shape
    h2, d_out = w2_mu.shape
    assert h == h2

    dinp = _round_up(d_in, _LANE)
    hp = _round_up(h, _LANE)
    doutp = _round_up(d_out, _LANE)

    padded = dict(
        w1_mu=_pad2d(w1_mu, dinp, hp), w1_ls=_pad2d(w1_ls, dinp, hp),
        b1_mu=_pad2d(b1_mu, 1, hp),    b1_ls=_pad2d(b1_ls, 1, hp),
        w2_mu=_pad2d(w2_mu, hp, doutp), w2_ls=_pad2d(w2_ls, hp, doutp),
        b2_mu=_pad2d(b2_mu, 1, doutp), b2_ls=_pad2d(b2_ls, 1, doutp),
    )
    dims = dict(d_in=d_in, h=h, d_out=d_out, dinp=dinp, hp=hp, doutp=doutp)
    return padded, dims


# ----------------------------------------------------------------------------
# Module-level forward (matches torch semantics: returns (x2, kl1 + kl2))
# ----------------------------------------------------------------------------
def sparse_bnn_forward(x, padded, dims, *, max_tb=256):
    B, d_in = x.shape
    assert d_in == dims["d_in"]
    dinp, hp, doutp = dims["dinp"], dims["hp"], dims["doutp"]

    # Batch tiling: single grid step for small B; 256-row tiles otherwise.
    Bp = _round_up(B, _SUBLANE)
    tb = Bp if Bp <= max_tb else max_tb
    Bp = _round_up(Bp, tb)
    nsteps = Bp // tb

    xp = _pad2d(x, Bp, dinp)

    n_param = dinp * hp + hp + hp * doutp + doutp
    flops = 2 * Bp * dinp * hp + 2 * Bp * hp * doutp + 8 * n_param
    bytes_accessed = 4 * (Bp * dinp + 2 * n_param + Bp * doutp + 1)

    # VMEM budget from actual padded footprint (x/y tiles + all params, with
    # double buffering and headroom for the f32 intermediate and bf16 casts).
    io_bytes = 4 * (tb * dinp + tb * doutp + 2 * n_param)
    vmem_limit = min(int(4 * io_bytes + (8 << 20)), 128 << 20)

    def resident(shape):
        # Constant index_map: DMA'd once, stays resident across the grid.
        return pl.BlockSpec(shape, lambda i: (0, 0))

    y, kl = pl.pallas_call(
        _fused_kernel,
        grid=(nsteps,),
        in_specs=[
            pl.BlockSpec((tb, dinp), lambda i: (i, 0)),   # x batch tile
            resident((dinp, hp)), resident((dinp, hp)),   # W1 mu / logsig
            resident((1, hp)), resident((1, hp)),         # b1 mu / logsig
            resident((hp, doutp)), resident((hp, doutp)), # W2 mu / logsig
            resident((1, doutp)), resident((1, doutp)),   # b2 mu / logsig
        ],
        out_specs=(
            pl.BlockSpec((tb, doutp), lambda i: (i, 0)),                 # y
            pl.BlockSpec(memory_space=pltpu.MemorySpace.SMEM),           # kl
        ),
        out_shape=(
            jax.ShapeDtypeStruct((Bp, doutp), jnp.float32),
            jax.ShapeDtypeStruct((1,), jnp.float32),
        ),
        compiler_params=pltpu.CompilerParams(
            dimension_semantics=("arbitrary",),
            vmem_limit_bytes=vmem_limit),
        cost_estimate=pl.CostEstimate(
            flops=flops, transcendentals=n_param, bytes_accessed=bytes_accessed),
    )(xp, padded["w1_mu"], padded["w1_ls"], padded["b1_mu"], padded["b1_ls"],
      padded["w2_mu"], padded["w2_ls"], padded["b2_mu"], padded["b2_ls"])

    return y[:B, :dims["d_out"]], kl[0]


def init_layer(key, d_in, d_out):
    k1, k2 = jax.random.split(key)
    w_mu = 0.1 * jax.random.normal(k1, (d_in, d_out), jnp.float32)
    w_logsig = jnp.full((d_in, d_out), -3.0, jnp.float32)
    b_mu = 0.1 * jax.random.normal(k2, (1, d_out), jnp.float32)
    b_logsig = jnp.full((1, d_out), -3.0, jnp.float32)
    return (w_mu, w_logsig, b_mu, b_logsig)


if __name__ == "__main__":
    key = jax.random.PRNGKey(0)
    kx, ke, kp = jax.random.split(key, 3)

    B, D_IN, H, D_OUT = 16, 32, 64, 16
    x = jax.random.normal(kx, (B, D_IN), jnp.float32)

    enc_params = init_layer(ke, D_IN, H)
    pred_params = init_layer(kp, H, D_OUT)

    padded, dims = prepare_params(enc_params, pred_params)   # pad ONCE
    y, kl = sparse_bnn_forward(x, padded, dims)
    jax.block_until_ready((y, kl))

    # Pure-JAX reference check.
    def ref_layer(xx, w_mu, w_ls, b_mu, b_ls):
        yy = xx @ w_mu + b_mu
        klf = lambda m, s: jnp.sum(0.5 * (jnp.exp(2 * s) + m * m - 1.0) - s)
        return yy, klf(w_mu, w_ls) + klf(b_mu, b_ls)

    r1, rkl1 = ref_layer(x, *enc_params)
    r2, rkl2 = ref_layer(r1, *pred_params)

    # bf16 MXU operands with f32 accumulation -> loosened forward tolerance.
    assert jnp.allclose(y, r2, atol=3e-2, rtol=3e-2), "forward mismatch"
    # KL math stays f32; only summation-order / padding differences remain.
    assert jnp.allclose(kl, rkl1 + rkl2, atol=1.0, rtol=1e-4), "KL mismatch"

    print("KERNEL_OK")
</pallas_src>

<mosaic_0001>
module attributes {stable_mosaic.version = 11 : i64} {
  func.func @_fused_kernel(%arg0: i32, %arg1: memref<16x128xf32, #tpu.memory_space<vmem>>, %arg2: memref<128x128xf32, #tpu.memory_space<vmem>>, %arg3: memref<128x128xf32, #tpu.memory_space<vmem>>, %arg4: memref<1x128xf32, #tpu.memory_space<vmem>>, %arg5: memref<1x128xf32, #tpu.memory_space<vmem>>, %arg6: memref<128x128xf32, #tpu.memory_space<vmem>>, %arg7: memref<128x128xf32, #tpu.memory_space<vmem>>, %arg8: memref<1x128xf32, #tpu.memory_space<vmem>>, %arg9: memref<1x128xf32, #tpu.memory_space<vmem>>, %arg10: memref<16x128xf32, #tpu.memory_space<vmem>>, %arg11: memref<1xf32, #tpu.memory_space<smem>>) attributes {dimension_semantics = [#tpu.dimension_semantics<arbitrary>], iteration_bounds = array<i64: 1>, scalar_prefetch = 0 : i64, scratch_operands = 0 : i64, tpu.core_type = #tpu.core_type<tc>, window_params = [{transform_indices = @transform_0, window_bounds = array<i64: 16, 128>}, {pipeline_mode = #tpu.pipeline_mode<synchronous>, transform_indices = @transform_1, window_bounds = array<i64: 128, 128>}, {pipeline_mode = #tpu.pipeline_mode<synchronous>, transform_indices = @transform_2, window_bounds = array<i64: 128, 128>}, {pipeline_mode = #tpu.pipeline_mode<synchronous>, transform_indices = @transform_3, window_bounds = array<i64: 1, 128>}, {pipeline_mode = #tpu.pipeline_mode<synchronous>, transform_indices = @transform_4, window_bounds = array<i64: 1, 128>}, {pipeline_mode = #tpu.pipeline_mode<synchronous>, transform_indices = @transform_5, window_bounds = array<i64: 128, 128>}, {pipeline_mode = #tpu.pipeline_mode<synchronous>, transform_indices = @transform_6, window_bounds = array<i64: 128, 128>}, {pipeline_mode = #tpu.pipeline_mode<synchronous>, transform_indices = @transform_7, window_bounds = array<i64: 1, 128>}, {pipeline_mode = #tpu.pipeline_mode<synchronous>, transform_indices = @transform_8, window_bounds = array<i64: 1, 128>}, {transform_indices = @transform_9, window_bounds = array<i64: 16, 128>}, {transform_indices = @transform_10, window_bounds = array<i64: 1>}]} {
    %c0 = arith.constant 0 : index
    %c0_0 = arith.constant 0 : index
    %0 = vector.load %arg2[%c0, %c0_0] : memref<128x128xf32, #tpu.memory_space<vmem>>, vector<128x128xf32>
    %c0_1 = arith.constant 0 : index
    %c0_2 = arith.constant 0 : index
    %1 = vector.load %arg6[%c0_1, %c0_2] : memref<128x128xf32, #tpu.memory_space<vmem>>, vector<128x128xf32>
    %c0_3 = arith.constant 0 : index
    %c0_4 = arith.constant 0 : index
    %2 = vector.load %arg1[%c0_3, %c0_4] : memref<16x128xf32, #tpu.memory_space<vmem>>, vector<16x128xf32>
    %3 = arith.truncf %2 : vector<16x128xf32> to vector<16x128xbf16>
    %4 = arith.truncf %0 : vector<128x128xf32> to vector<128x128xbf16>
    %cst = arith.constant dense<0.000000e+00> : vector<16x128xf32>
    %5 = tpu.matmul %3, %4, %cst {dimension_numbers = #tpu.dot_dimension_numbers<[1], [0], [0], [1], [0, 0, 1, 1], [], []>} : vector<16x128xbf16>, vector<128x128xbf16>, vector<16x128xf32> -> vector<16x128xf32>
    %c0_5 = arith.constant 0 : index
    %c0_6 = arith.constant 0 : index
    %6 = vector.load %arg4[%c0_5, %c0_6] : memref<1x128xf32, #tpu.memory_space<vmem>>, vector<1x128xf32>
    %7 = vector.broadcast %6 : vector<1x128xf32> to vector<16x128xf32>
    %8 = arith.addf %5, %7 : vector<16x128xf32>
    %9 = arith.truncf %8 : vector<16x128xf32> to vector<16x128xbf16>
    %10 = arith.truncf %1 : vector<128x128xf32> to vector<128x128xbf16>
    %cst_7 = arith.constant dense<0.000000e+00> : vector<16x128xf32>
    %11 = tpu.matmul %9, %10, %cst_7 {dimension_numbers = #tpu.dot_dimension_numbers<[1], [0], [0], [1], [0, 0, 1, 1], [], []>} : vector<16x128xbf16>, vector<128x128xbf16>, vector<16x128xf32> -> vector<16x128xf32>
    %c0_8 = arith.constant 0 : index
    %c0_9 = arith.constant 0 : index
    %12 = vector.load %arg8[%c0_8, %c0_9] : memref<1x128xf32, #tpu.memory_space<vmem>>, vector<1x128xf32>
    %13 = vector.broadcast %12 : vector<1x128xf32> to vector<16x128xf32>
    %14 = arith.addf %11, %13 : vector<16x128xf32>
    %c0_10 = arith.constant 0 : index
    %c0_11 = arith.constant 0 : index
    %15 = vector.load %arg10[%c0_10, %c0_11] : memref<16x128xf32, #tpu.memory_space<vmem>>, vector<16x128xf32>
    tpu.vector_store %arg10[%c0_10, %c0_11], %14 {strides = array<i32>} : memref<16x128xf32, #tpu.memory_space<vmem>>, vector<16x128xf32>,
    %c0_i32 = arith.constant 0 : i32
    %16 = arith.cmpi eq, %arg0, %c0_i32 : i32
    %17 = arith.extui %16 : i1 to i32
    %c0_i32_12 = arith.constant 0 : i32
    %18 = arith.cmpi ne, %17, %c0_i32_12 : i32
    scf.if %18 {
      %c0_13 = arith.constant 0 : index
      %c0_14 = arith.constant 0 : index
      %19 = vector.load %arg3[%c0_13, %c0_14] : memref<128x128xf32, #tpu.memory_space<vmem>>, vector<128x128xf32>
      %cst_15 = arith.constant 2.000000e+00 : f32
      %20 = vector.broadcast %cst_15 : f32 to vector<128x128xf32>
      %21 = arith.mulf %20, %19 : vector<128x128xf32>
      %22 = math.exp %21 : vector<128x128xf32>
      %23 = arith.mulf %0, %0 : vector<128x128xf32>
      %24 = arith.addf %22, %23 : vector<128x128xf32>
      %cst_16 = arith.constant 1.000000e+00 : f32
      %25 = vector.broadcast %cst_16 : f32 to vector<128x128xf32>
      %26 = arith.subf %24, %25 : vector<128x128xf32>
      %cst_17 = arith.constant 5.000000e-01 : f32
      %27 = vector.broadcast %cst_17 : f32 to vector<128x128xf32>
      %28 = arith.mulf %27, %26 : vector<128x128xf32>
      %29 = arith.subf %28, %19 : vector<128x128xf32>
      %30 = vector.shape_cast %29 : vector<128x128xf32> to vector<1x128x128xf32>
      %cst_18 = arith.constant dense<0.000000e+00> : vector<1xf32>
      %31 = vector.multi_reduction <add>, %30, %cst_18 [1, 2] : vector<1x128x128xf32> to vector<1xf32>
      %32 = vector.shape_cast %31 : vector<1xf32> to vector<1x1x1xf32>
      %33 = vector.extract %32[0, 0, 0] : f32 from vector<1x1x1xf32>
      %c0_19 = arith.constant 0 : index
      %c0_20 = arith.constant 0 : index
      %34 = vector.load %arg4[%c0_19, %c0_20] : memref<1x128xf32, #tpu.memory_space<vmem>>, vector<1x128xf32>
      %c0_21 = arith.constant 0 : index
      %c0_22 = arith.constant 0 : index
      %35 = vector.load %arg5[%c0_21, %c0_22] : memref<1x128xf32, #tpu.memory_space<vmem>>, vector<1x128xf32>
      %cst_23 = arith.constant 2.000000e+00 : f32
      %36 = vector.broadcast %cst_23 : f32 to vector<1x128xf32>
      %37 = arith.mulf %36, %35 : vector<1x128xf32>
      %38 = math.exp %37 : vector<1x128xf32>
      %39 = arith.mulf %34, %34 : vector<1x128xf32>
      %40 = arith.addf %38, %39 : vector<1x128xf32>
      %cst_24 = arith.constant 1.000000e+00 : f32
      %41 = vector.broadcast %cst_24 : f32 to vector<1x128xf32>
      %42 = arith.subf %40, %41 : vector<1x128xf32>
      %cst_25 = arith.constant 5.000000e-01 : f32
      %43 = vector.broadcast %cst_25 : f32 to vector<1x128xf32>
      %44 = arith.mulf %43, %42 : vector<1x128xf32>
      %45 = arith.subf %44, %35 : vector<1x128xf32>
      %46 = vector.shape_cast %45 : vector<1x128xf32> to vector<1x1x128xf32>
      %cst_26 = arith.constant dense<0.000000e+00> : vector<1xf32>
      %47 = vector.multi_reduction <add>, %46, %cst_26 [1, 2] : vector<1x1x128xf32> to vector<1xf32>
      %48 = vector.shape_cast %47 : vector<1xf32> to vector<1x1x1xf32>
      %49 = vector.extract %48[0, 0, 0] : f32 from vector<1x1x1xf32>
      %50 = arith.addf %33, %49 : f32
      %c0_27 = arith.constant 0 : index
      %c0_28 = arith.constant 0 : index
      %51 = vector.load %arg7[%c0_27, %c0_28] : memref<128x128xf32, #tpu.memory_space<vmem>>, vector<128x128xf32>
      %cst_29 = arith.constant 2.000000e+00 : f32
      %52 = vector.broadcast %cst_29 : f32 to vector<128x128xf32>
      %53 = arith.mulf %52, %51 : vector<128x128xf32>
      %54 = math.exp %53 : vector<128x128xf32>
      %55 = arith.mulf %1, %1 : vector<128x128xf32>
      %56 = arith.addf %54, %55 : vector<128x128xf32>
      %cst_30 = arith.constant 1.000000e+00 : f32
      %57 = vector.broadcast %cst_30 : f32 to vector<128x128xf32>
      %58 = arith.subf %56, %57 : vector<128x128xf32>
      %cst_31 = arith.constant 5.000000e-01 : f32
      %59 = vector.broadcast %cst_31 : f32 to vector<128x128xf32>
      %60 = arith.mulf %59, %58 : vector<128x128xf32>
      %61 = arith.subf %60, %51 : vector<128x128xf32>
      %62 = vector.shape_cast %61 : vector<128x128xf32> to vector<1x128x128xf32>
      %cst_32 = arith.constant dense<0.000000e+00> : vector<1xf32>
      %63 = vector.multi_reduction <add>, %62, %cst_32 [1, 2] : vector<1x128x128xf32> to vector<1xf32>
      %64 = vector.shape_cast %63 : vector<1xf32> to vector<1x1x1xf32>
      %65 = vector.extract %64[0, 0, 0] : f32 from vector<1x1x1xf32>
      %66 = arith.addf %50, %65 : f32
      %c0_33 = arith.constant 0 : index
      %c0_34 = arith.constant 0 : index
      %67 = vector.load %arg8[%c0_33, %c0_34] : memref<1x128xf32, #tpu.memory_space<vmem>>, vector<1x128xf32>
      %c0_35 = arith.constant 0 : index
      %c0_36 = arith.constant 0 : index
      %68 = vector.load %arg9[%c0_35, %c0_36] : memref<1x128xf32, #tpu.memory_space<vmem>>, vector<1x128xf32>
      %cst_37 = arith.constant 2.000000e+00 : f32
      %69 = vector.broadcast %cst_37 : f32 to vector<1x128xf32>
      %70 = arith.mulf %69, %68 : vector<1x128xf32>
      %71 = math.exp %70 : vector<1x128xf32>
      %72 = arith.mulf %67, %67 : vector<1x128xf32>
      %73 = arith.addf %71, %72 : vector<1x128xf32>
      %cst_38 = arith.constant 1.000000e+00 : f32
      %74 = vector.broadcast %cst_38 : f32 to vector<1x128xf32>
      %75 = arith.subf %73, %74 : vector<1x128xf32>
      %cst_39 = arith.constant 5.000000e-01 : f32
      %76 = vector.broadcast %cst_39 : f32 to vector<1x128xf32>
      %77 = arith.mulf %76, %75 : vector<1x128xf32>
      %78 = arith.subf %77, %68 : vector<1x128xf32>
      %79 = vector.shape_cast %78 : vector<1x128xf32> to vector<1x1x128xf32>
      %cst_40 = arith.constant dense<0.000000e+00> : vector<1xf32>
      %80 = vector.multi_reduction <add>, %79, %cst_40 [1, 2] : vector<1x1x128xf32> to vector<1xf32>
      %81 = vector.shape_cast %80 : vector<1xf32> to vector<1x1x1xf32>
      %82 = vector.extract %81[0, 0, 0] : f32 from vector<1x1x1xf32>
      %83 = arith.addf %66, %82 : f32
      %c0_41 = arith.constant 0 : index
      %84 = memref.load %arg11[%c0_41] : memref<1xf32, #tpu.memory_space<smem>>
      memref.store %83, %arg11[%c0_41] : memref<1xf32, #tpu.memory_space<smem>>
    } else {
    }
    return
  }
  func.func @transform_0(%arg0: i32) -> (i32, i32) {
    %c0_i32 = arith.constant 0 : i32
    %c0_i32_0 = arith.constant 0 : i32
    return %arg0, %c0_i32 : i32, i32
  }
  func.func @transform_1(%arg0: i32) -> (i32, i32) {
    %c0_i32 = arith.constant 0 : i32
    %c0_i32_0 = arith.constant 0 : i32
    %c0_i32_1 = arith.constant 0 : i32
    return %c0_i32, %c0_i32_0 : i32, i32
  }
  func.func @transform_2(%arg0: i32) -> (i32, i32) {
    %c0_i32 = arith.constant 0 : i32
    %c0_i32_0 = arith.constant 0 : i32
    %c0_i32_1 = arith.constant 0 : i32
    return %c0_i32, %c0_i32_0 : i32, i32
  }
  func.func @transform_3(%arg0: i32) -> (i32, i32) {
    %c0_i32 = arith.constant 0 : i32
    %c0_i32_0 = arith.constant 0 : i32
    %c0_i32_1 = arith.constant 0 : i32
    return %c0_i32, %c0_i32_0 : i32, i32
  }
  func.func @transform_4(%arg0: i32) -> (i32, i32) {
    %c0_i32 = arith.constant 0 : i32
    %c0_i32_0 = arith.constant 0 : i32
    %c0_i32_1 = arith.constant 0 : i32
    return %c0_i32, %c0_i32_0 : i32, i32
  }
  func.func @transform_5(%arg0: i32) -> (i32, i32) {
    %c0_i32 = arith.constant 0 : i32
    %c0_i32_0 = arith.constant 0 : i32
    %c0_i32_1 = arith.constant 0 : i32
    return %c0_i32, %c0_i32_0 : i32, i32
  }
  func.func @transform_6(%arg0: i32) -> (i32, i32) {
    %c0_i32 = arith.constant 0 : i32
    %c0_i32_0 = arith.constant 0 : i32
    %c0_i32_1 = arith.constant 0 : i32
    return %c0_i32, %c0_i32_0 : i32, i32
  }
  func.func @transform_7(%arg0: i32) -> (i32, i32) {
    %c0_i32 = arith.constant 0 : i32
    %c0_i32_0 = arith.constant 0 : i32
    %c0_i32_1 = arith.constant 0 : i32
    return %c0_i32, %c0_i32_0 : i32, i32
  }
  func.func @transform_8(%arg0: i32) -> (i32, i32) {
    %c0_i32 = arith.constant 0 : i32
    %c0_i32_0 = arith.constant 0 : i32
    %c0_i32_1 = arith.constant 0 : i32
    return %c0_i32, %c0_i32_0 : i32, i32
  }
  func.func @transform_9(%arg0: i32) -> (i32, i32) {
    %c0_i32 = arith.constant 0 : i32
    %c0_i32_0 = arith.constant 0 : i32
    return %arg0, %c0_i32 : i32, i32
  }
  func.func @transform_10(%arg0: i32) -> i32 {
    %c0_i32 = arith.constant 0 : i32
    %c0_i32_0 = arith.constant 0 : i32
    return %c0_i32 : i32
  }
}

</mosaic_0001>

<llo_original>
// kernel: tpu_custom_call.1
$region0: #{tpu_custom_call.1}
  #allocation0 [shape = 'u32[]', space=smem, size = 0x4, offset = 0x4, fixed_abs, tag = 'smem constant byte address 0x4 - core index']
  #allocation1 [shape = 'u32[144,128]{1,0:T(1,128)}', space=vmem, size = 0x12000, scoped, tag = 'internal scratch']
  %s0 = inlined_call_operand.hbm [shape: f32[16,128], index: 0, kind: input, shape index: {}]
  %s1 = inlined_call_operand.hbm [shape: f32[128,128], index: 1, kind: input, shape index: {}]
  %s2 = inlined_call_operand.hbm [shape: f32[128,128], index: 2, kind: input, shape index: {}]
  %s3 = inlined_call_operand.vmem [shape: f32[1,128], index: 3, kind: input, shape index: {}]
  %s4 = inlined_call_operand.vmem [shape: f32[1,128], index: 4, kind: input, shape index: {}]
  %s5 = inlined_call_operand.hbm [shape: f32[128,128], index: 5, kind: input, shape index: {}]
  %s6 = inlined_call_operand.hbm [shape: f32[128,128], index: 6, kind: input, shape index: {}]
  %s7 = inlined_call_operand.vmem [shape: f32[1,128], index: 7, kind: input, shape index: {}]
  %s8 = inlined_call_operand.vmem [shape: f32[1,128], index: 8, kind: input, shape index: {}]
  %s9 = inlined_call_operand.hbm [shape: f32[16,128], index: 9, kind: output, shape index: {0}]
  %s10 = inlined_call_operand.hbm [shape: f32[1], index: 10, kind: output, shape index: {1}]
  %11 = xla_tuple %s9, %s10
  %s12 = sld [smem:[#allocation0]]
  $region78: #{tpu_custom_call.1} parent=0
    _
  %s14 = ssub.s32 1, %s12
  %s15 = scalar_select 0, %s14, %s12
  $region1: #{tpu_custom_call.1} parent=0
    #allocation2 [shape = 'u8[8192]{0}', space=vmem, size = 0x2000, scoped, tag = 'input window, operand 0, single buffered']
    #allocation3 [shape = 's32[1]{0}', space=sflag, size = 0x4, scoped, tag = 'scoped memory for tpu_custom_call.1']
    #allocation4 [shape = 's32[1]{0}', space=sflag, size = 0x4, scoped, tag = 'scoped memory for tpu_custom_call.1']
    #allocation5 [shape = 's32[1]{0}', space=sflag, size = 0x4, scoped, tag = 'scoped memory for tpu_custom_call.1']
    #allocation6 [shape = 'u8[65536]{0}', space=vmem, size = 0x10000, scoped, tag = 'input window, operand 1, single buffered']
    #allocation7 [shape = 's32[1]{0}', space=sflag, size = 0x4, scoped, tag = 'scoped memory for tpu_custom_call.1']
    #allocation8 [shape = 'u8[65536]{0}', space=vmem, size = 0x10000, scoped, tag = 'input window, operand 2, single buffered']
    #allocation9 [shape = 'u8[65536]{0}', space=vmem, size = 0x10000, scoped, tag = 'input window, operand 5, single buffered']
    #allocation10 [shape = 's32[1]{0}', space=sflag, size = 0x4, scoped, tag = 'scoped memory for tpu_custom_call.1']
    #allocation11 [shape = 'u8[65536]{0}', space=vmem, size = 0x10000, scoped, tag = 'input window, operand 6, single buffered']
    #allocation12 [shape = 'u8[8192]{0}', space=vmem, size = 0x2000, scoped, tag = 'output window, operand 0, single buffered']
    #allocation13 [shape = 'u8[512]{0}', space=smem, size = 0x200, scoped, tag = 'output window, operand 1, single buffered']
    %16 = vsyncpa [#allocation3], 0
    %17 = vsyncpa [#allocation7], 0
    %18 = vsyncpa [#allocation10], 0
    %19 = vsyncpa [#allocation4], 0
    %20 = vsyncpa [#allocation5], 0
    // Predicated region
    $region2: #{tpu_custom_call.1} parent=1 // pred_check
      _
    $region3: #{tpu_custom_call.1} parent=1 // pred_check_branch
      %22 = sbr.rel (0) target = $region5
    $region4: #{tpu_custom_call.1} parent=1 // pred_region
      %s24 = ssub.s32 256, 256
      %25 = vsyncadd [#allocation3], %s24
      %s26 = sshll.u32 [#allocation2], 4
      %s27 = int_to_ptr.vmem [resolvable:$true] %s26
      %32 = dma.hbm_to_vmem [thread:$0]  %s0, 256, %s27, [#allocation3], 128, 128, 8
    $region5: #{tpu_custom_call.1} parent=1 // pred_fallthru
      _
    // Predicated region
    $region6: #{tpu_custom_call.1} parent=1 // pred_check
      _
    $region7: #{tpu_custom_call.1} parent=1 // pred_check_branch
      %34 = sbr.rel (0) target = $region9
    $region8: #{tpu_custom_call.1} parent=1 // pred_region
      %s36 = ssub.s32 2048, 2048
      %37 = vsyncadd [#allocation7], %s36
      %s38 = sshll.u32 [#allocation6], 4
      %s39 = int_to_ptr.vmem [resolvable:$true] %s38
      %44 = dma.hbm_to_vmem [thread:$0]  %s1, 2048, %s39, [#allocation7], 128, 128, 8
    $region9: #{tpu_custom_call.1} parent=1 // pred_fallthru
      _
    // Predicated region
    $region10: #{tpu_custom_call.1} parent=1 // pred_check
      _
    $region11: #{tpu_custom_call.1} parent=1 // pred_check_branch
      %46 = sbr.rel (0) target = $region13
    $region12: #{tpu_custom_call.1} parent=1 // pred_region
      %s48 = ssub.s32 2048, 2048
      %49 = vsyncadd [#allocation7], %s48
      %s50 = sshll.u32 [#allocation8], 4
      %s51 = int_to_ptr.vmem [resolvable:$true] %s50
      %56 = dma.hbm_to_vmem [thread:$0]  %s2, 2048, %s51, [#allocation7], 128, 128, 8
    $region13: #{tpu_custom_call.1} parent=1 // pred_fallthru
      _
    // Predicated region
    $region14: #{tpu_custom_call.1} parent=1 // pred_check
      _
    $region15: #{tpu_custom_call.1} parent=1 // pred_check_branch
      %58 = sbr.rel (0) target = $region17
    $region16: #{tpu_custom_call.1} parent=1 // pred_region
      _
    $region17: #{tpu_custom_call.1} parent=1 // pred_fallthru
      _
    // Predicated region
    $region18: #{tpu_custom_call.1} parent=1 // pred_check
      _
    $region19: #{tpu_custom_call.1} parent=1 // pred_check_branch
      %60 = sbr.rel (0) target = $region21
    $region20: #{tpu_custom_call.1} parent=1 // pred_region
      _
    $region21: #{tpu_custom_call.1} parent=1 // pred_fallthru
      _
    // Predicated region
    $region22: #{tpu_custom_call.1} parent=1 // pred_check
      _
    $region23: #{tpu_custom_call.1} parent=1 // pred_check_branch
      %62 = sbr.rel (0) target = $region25
    $region24: #{tpu_custom_call.1} parent=1 // pred_region
      %s64 = ssub.s32 2048, 2048
      %65 = vsyncadd [#allocation10], %s64
      %s66 = sshll.u32 [#allocation9], 4
      %s67 = int_to_ptr.vmem [resolvable:$true] %s66
      %72 = dma.hbm_to_vmem [thread:$0]  %s5, 2048, %s67, [#allocation10], 128, 128, 8
    $region25: #{tpu_custom_call.1} parent=1 // pred_fallthru
      _
    // Predicated region
    $region26: #{tpu_custom_call.1} parent=1 // pred_check
      _
    $region27: #{tpu_custom_call.1} parent=1 // pred_check_branch
      %74 = sbr.rel (0) target = $region29
    $region28: #{tpu_custom_call.1} parent=1 // pred_region
      %s76 = ssub.s32 2048, 2048
      %77 = vsyncadd [#allocation10], %s76
      %s78 = sshll.u32 [#allocation11], 4
      %s79 = int_to_ptr.vmem [resolvable:$true] %s78
      %84 = dma.hbm_to_vmem [thread:$0]  %s6, 2048, %s79, [#allocation10], 128, 128, 8
    $region29: #{tpu_custom_call.1} parent=1 // pred_fallthru
      _
    // Predicated region
    $region30: #{tpu_custom_call.1} parent=1 // pred_check
      _
    $region31: #{tpu_custom_call.1} parent=1 // pred_check_branch
      %86 = sbr.rel (0) target = $region33
    $region32: #{tpu_custom_call.1} parent=1 // pred_region
      _
    $region33: #{tpu_custom_call.1} parent=1 // pred_fallthru
      _
    // Predicated region
    $region34: #{tpu_custom_call.1} parent=1 // pred_check
      _
    $region35: #{tpu_custom_call.1} parent=1 // pred_check_branch
      %88 = sbr.rel (0) target = $region37
    $region36: #{tpu_custom_call.1} parent=1 // pred_region
      _
    $region37: #{tpu_custom_call.1} parent=1 // pred_fallthru
      _
    // Predicated region
    $region38: #{tpu_custom_call.1} parent=1 // pred_check
      _
    $region39: #{tpu_custom_call.1} parent=1 // pred_check_branch
      %90 = sbr.rel (0) target = $region41
    $region40: #{tpu_custom_call.1} parent=1 // pred_region
      %91 = dma.done [#allocation3], 256
    $region41: #{tpu_custom_call.1} parent=1 // pred_fallthru
      _
    // Predicated region
    $region42: #{tpu_custom_call.1} parent=1 // pred_check
      _
    $region43: #{tpu_custom_call.1} parent=1 // pred_check_branch
      %93 = sbr.rel (0) target = $region45
    $region44: #{tpu_custom_call.1} parent=1 // pred_region
      %94 = dma.done [#allocation7], 2048
    $region45: #{tpu_custom_call.1} parent=1 // pred_fallthru
      _
    // Predicated region
    $region46: #{tpu_custom_call.1} parent=1 // pred_check
      _
    $region47: #{tpu_custom_call.1} parent=1 // pred_check_branch
      %96 = sbr.rel (0) target = $region49
    $region48: #{tpu_custom_call.1} parent=1 // pred_region
      %97 = dma.done [#allocation7], 2048
    $region49: #{tpu_custom_call.1} parent=1 // pred_fallthru
      _
    // Predicated region
    $region50: #{tpu_custom_call.1} parent=1 // pred_check
      _
    $region51: #{tpu_custom_call.1} parent=1 // pred_check_branch
      %99 = sbr.rel (0) target = $region53
    $region52: #{tpu_custom_call.1} parent=1 // pred_region
      %100 = dma.done [#allocation10], 2048
    $region53: #{tpu_custom_call.1} parent=1 // pred_fallthru
      _
    // Predicated region
    $region54: #{tpu_custom_call.1} parent=1 // pred_check
      _
    $region55: #{tpu_custom_call.1} parent=1 // pred_check_branch
      %102 = sbr.rel (0) target = $region57
    $region56: #{tpu_custom_call.1} parent=1 // pred_region
      %103 = dma.done [#allocation10], 2048
    $region57: #{tpu_custom_call.1} parent=1 // pred_fallthru
      _
    %v105 = vld [vmem:[#allocation6] sm:$0xff]
    %v106 = vld [vmem:[#allocation6 + $0x8] sm:$0xff]
    %v107 = vld [vmem:[#allocation6 + $0x10] sm:$0xff]
    %v108 = vld [vmem:[#allocation6 + $0x18] sm:$0xff]
    %v109 = vld [vmem:[#allocation6 + $0x20] sm:$0xff]
    %v110 = vld [vmem:[#allocation6 + $0x28] sm:$0xff]
    %v111 = vld [vmem:[#allocation6 + $0x30] sm:$0xff]
    %v112 = vld [vmem:[#allocation6 + $0x38] sm:$0xff]
    %v113 = vld [vmem:[#allocation6 + $0x40] sm:$0xff]
    %v114 = vld [vmem:[#allocation6 + $0x48] sm:$0xff]
    %v115 = vld [vmem:[#allocation6 + $0x50] sm:$0xff]
    %v116 = vld [vmem:[#allocation6 + $0x58] sm:$0xff]
    %v117 = vld [vmem:[#allocation6 + $0x60] sm:$0xff]
    %v118 = vld [vmem:[#allocation6 + $0x68] sm:$0xff]
    %v119 = vld [vmem:[#allocation6 + $0x70] sm:$0xff]
    %v120 = vld [vmem:[#allocation6 + $0x78] sm:$0xff]
    %v121 = vld [vmem:[#allocation9] sm:$0xff]
    %v122 = vld [vmem:[#allocation9 + $0x8] sm:$0xff]
    %v123 = vld [vmem:[#allocation9 + $0x10] sm:$0xff]
    %v124 = vld [vmem:[#allocation9 + $0x18] sm:$0xff]
    %v125 = vld [vmem:[#allocation9 + $0x20] sm:$0xff]
    %v126 = vld [vmem:[#allocation9 + $0x28] sm:$0xff]
    %v127 = vld [vmem:[#allocation9 + $0x30] sm:$0xff]
    %v128 = vld [vmem:[#allocation9 + $0x38] sm:$0xff]
    %v129 = vld [vmem:[#allocation9 + $0x40] sm:$0xff]
    %v130 = vld [vmem:[#allocation9 + $0x48] sm:$0xff]
    %v131 = vld [vmem:[#allocation9 + $0x50] sm:$0xff]
    %v132 = vld [vmem:[#allocation9 + $0x58] sm:$0xff]
    %v133 = vld [vmem:[#allocation9 + $0x60] sm:$0xff]
    %v134 = vld [vmem:[#allocation9 + $0x68] sm:$0xff]
    %v135 = vld [vmem:[#allocation9 + $0x70] sm:$0xff]
    %v136 = vld [vmem:[#allocation9 + $0x78] sm:$0xff]
    %v137 = vld [vmem:[#allocation2] sm:$0xff]
    %v138 = vld [vmem:[#allocation2 + $0x8] sm:$0xff]
    %v139 = vpack.c.bf16 %v138, %v137
    %v140 = vpack.c.bf16 %v106, %v105
    %v141 = vpack.c.bf16 %v108, %v107
    %v142 = vpack.c.bf16 %v110, %v109
    %v143 = vpack.c.bf16 %v112, %v111
    %v144 = vpack.c.bf16 %v114, %v113
    %v145 = vpack.c.bf16 %v116, %v115
    %v146 = vpack.c.bf16 %v118, %v117
    %v147 = vpack.c.bf16 %v120, %v119
    %v148 = vld [vmem:[%s3] sm:$0x1]
    %v150 = vlaneseq
    %v151 = vshrl.u32 %v150, 7
    %v152 = vsub.s32 0, %v151
    %v153 = vrot.slane %v148, %v152
    %155 = vmatprep.subr.bf16.mxu0 0
    %156 = vmatpush1.bf16.msra.mxu0 %v147
    %157 = vmatprep.subr.bf16.mxu0 0
    %158 = vmatpush1.bf16.msra.mxu0 %v146
    %159 = vmatprep.subr.bf16.mxu0 0
    %160 = vmatpush1.bf16.msra.mxu0 %v145
    %161 = vmatprep.subr.bf16.mxu0 0
    %162 = vmatpush1.bf16.msra.mxu0 %v144
    %163 = vmatprep.subr.bf16.mxu0 0
    %164 = vmatpush1.bf16.msra.mxu0 %v143
    %165 = vmatprep.subr.bf16.mxu0 0
    %166 = vmatpush1.bf16.msra.mxu0 %v142
    %167 = vmatprep.subr.bf16.mxu0 0
    %168 = vmatpush1.bf16.msra.mxu0 %v141
    %169 = vmatprep.subr.bf16.mxu0 0
    %170 = vmatpush1.bf16.msra.mxu0 %v140
    %171 = vmatprep.subr.bf16.mxu0 0
    %172 = vmatpush2.bf16.msra.mxu0 0
    %173 = vmatprep.subr.bf16.mxu0 0
    %174 = vmatpush2.bf16.msra.mxu0 0
    %175 = vmatprep.subr.bf16.mxu0 0
    %176 = vmatpush2.bf16.msra.mxu0 0
    %177 = vmatprep.subr.bf16.mxu0 0
    %178 = vmatpush2.bf16.msra.mxu0 0
    %179 = vmatprep.subr.bf16.mxu0 0
    %180 = vmatpush2.bf16.msra.mxu0 0
    %181 = vmatprep.subr.bf16.mxu0 0
    %182 = vmatpush2.bf16.msra.mxu0 0
    %183 = vmatprep.subr.bf16.mxu0 0
    %184 = vmatpush2.bf16.msra.mxu0 0
    %185 = vmatprep.subr.bf16.mxu0 0
    %186 = vmatpush2.bf16.msra.mxu0 0
    %187 = vmatprep.mubr.bf16.mxu0 0
    %188 = vmatmul.mubr.bf16.gmra.mxu0 %v139
    %v189 = vpop.f32.mrf.mxu0
    %v190 = vadd.f32 %v153, %v189
    %v191 = vpop.f32.mrf.mxu0
    %v192 = vpop.f32.mrf.mxu0
    %v193 = vadd.f32 %v153, %v192
    %v194 = vpop.f32.mrf.mxu0
    %195 = vdwg.mxu0
    %v196 = vpack.c.bf16 %v193, %v190
    %v197 = vpack.c.bf16 %v122, %v121
    %v198 = vpack.c.bf16 %v124, %v123
    %v199 = vpack.c.bf16 %v126, %v125
    %v200 = vpack.c.bf16 %v128, %v127
    %v201 = vpack.c.bf16 %v130, %v129
    %v202 = vpack.c.bf16 %v132, %v131
    %v203 = vpack.c.bf16 %v134, %v133
    %v204 = vpack.c.bf16 %v136, %v135
    %v205 = vld [vmem:[%s7] sm:$0x1]
    %v207 = vlaneseq
    %v208 = vshrl.u32 %v207, 7
    %v209 = vsub.s32 0, %v208
    %v210 = vrot.slane %v205, %v209
    %212 = vmatprep.subr.bf16.mxu0 0
    %213 = vmatpush1.bf16.msra.mxu0 %v204
    %214 = vmatprep.subr.bf16.mxu0 0
    %215 = vmatpush1.bf16.msra.mxu0 %v203
    %216 = vmatprep.subr.bf16.mxu0 0
    %217 = vmatpush1.bf16.msra.mxu0 %v202
    %218 = vmatprep.subr.bf16.mxu0 0
    %219 = vmatpush1.bf16.msra.mxu0 %v201
    %220 = vmatprep.subr.bf16.mxu0 0
    %221 = vmatpush1.bf16.msra.mxu0 %v200
    %222 = vmatprep.subr.bf16.mxu0 0
    %223 = vmatpush1.bf16.msra.mxu0 %v199
    %224 = vmatprep.subr.bf16.mxu0 0
    %225 = vmatpush1.bf16.msra.mxu0 %v198
    %226 = vmatprep.subr.bf16.mxu0 0
    %227 = vmatpush1.bf16.msra.mxu0 %v197
    %228 = vmatprep.subr.bf16.mxu0 0
    %229 = vmatpush2.bf16.msra.mxu0 0
    %230 = vmatprep.subr.bf16.mxu0 0
    %231 = vmatpush2.bf16.msra.mxu0 0
    %232 = vmatprep.subr.bf16.mxu0 0
    %233 = vmatpush2.bf16.msra.mxu0 0
    %234 = vmatprep.subr.bf16.mxu0 0
    %235 = vmatpush2.bf16.msra.mxu0 0
    %236 = vmatprep.subr.bf16.mxu0 0
    %237 = vmatpush2.bf16.msra.mxu0 0
    %238 = vmatprep.subr.bf16.mxu0 0
    %239 = vmatpush2.bf16.msra.mxu0 0
    %240 = vmatprep.subr.bf16.mxu0 0
    %241 = vmatpush2.bf16.msra.mxu0 0
    %242 = vmatprep.subr.bf16.mxu0 0
    %243 = vmatpush2.bf16.msra.mxu0 0
    %244 = vmatprep.mubr.bf16.mxu0 0
    %245 = vmatmul.mubr.bf16.gmra.mxu0 %v196
    %v246 = vpop.f32.mrf.mxu0
    %v247 = vadd.f32 %v210, %v246
    %v248 = vpop.f32.mrf.mxu0
    %v249 = vpop.f32.mrf.mxu0
    %v250 = vadd.f32 %v210, %v249
    %v251 = vpop.f32.mrf.mxu0
    %252 = vdwg.mxu0
    %253 = vst [vmem:[#allocation12] sm:$0xff] %v247
    %254 = vst [vmem:[#allocation12 + $0x8] sm:$0xff] %v250
    %p255 = scmp.eq.s32.totalorder 0, 0
    // Predicated region
    $region58: #{tpu_custom_call.1} parent=1 // pred_check
      %p256 = pneg %p255
    $region59: #{tpu_custom_call.1} parent=1 // pred_check_branch
      %258 = sbr.rel (%p256) target = $region61
    $region60: #{tpu_custom_call.1} parent=1 // pred_region
      %v259 = vld [vmem:[#allocation8] sm:$0xff]
      %v260 = vld [vmem:[#allocation8 + $0x8] sm:$0xff]
      %v261 = vld [vmem:[#allocation8 + $0x10] sm:$0xff]
      %v262 = vld [vmem:[#allocation8 + $0x18] sm:$0xff]
      %v263 = vld [vmem:[#allocation8 + $0x20] sm:$0xff]
      %v264 = vld [vmem:[#allocation8 + $0x28] sm:$0xff]
      %v265 = vld [vmem:[#allocation8 + $0x30] sm:$0xff]
      %v266 = vld [vmem:[#allocation8 + $0x38] sm:$0xff]
      %v267 = vld [vmem:[#allocation8 + $0x40] sm:$0xff]
      %v268 = vld [vmem:[#allocation8 + $0x48] sm:$0xff]
      %v269 = vld [vmem:[#allocation8 + $0x50] sm:$0xff]
      %v270 = vld [vmem:[#allocation8 + $0x58] sm:$0xff]
      %v271 = vld [vmem:[#allocation8 + $0x60] sm:$0xff]
      %v272 = vld [vmem:[#allocation8 + $0x68] sm:$0xff]
      %v273 = vld [vmem:[#allocation8 + $0x70] sm:$0xff]
      %v274 = vld [vmem:[#allocation8 + $0x78] sm:$0xff]
      %v275 = vmul.f32 %v259, 2.0
      %v276 = vmul.f32 %v260, 2.0
      %v277 = vmul.f32 %v261, 2.0
      %v278 = vmul.f32 %v262, 2.0
      %v279 = vmul.f32 %v263, 2.0
      %v280 = vmul.f32 %v264, 2.0
      %v281 = vmul.f32 %v265, 2.0
      %v282 = vmul.f32 %v266, 2.0
      %v283 = vmul.f32 %v267, 2.0
      %v284 = vmul.f32 %v268, 2.0
      %v285 = vmul.f32 %v269, 2.0
      %v286 = vmul.f32 %v270, 2.0
      %v287 = vmul.f32 %v271, 2.0
      %v288 = vmul.f32 %v272, 2.0
      %v289 = vmul.f32 %v273, 2.0
      %v290 = vmul.f32 %v274, 2.0
      %v291 = vmul.f32 %v275, 1.442695
      %v292 = vpow.pop %v291
      %v293 = vmul.f32 %v276, 1.442695
      %v294 = vpow.pop %v293
      %v295 = vmul.f32 %v277, 1.442695
      %v296 = vpow.pop %v295
      %v297 = vmul.f32 %v278, 1.442695
      %v298 = vpow.pop %v297
      %v299 = vmul.f32 %v279, 1.442695
      %v300 = vpow.pop %v299
      %v301 = vmul.f32 %v280, 1.442695
      %v302 = vpow.pop %v301
      %v303 = vmul.f32 %v281, 1.442695
      %v304 = vpow.pop %v303
      %v305 = vmul.f32 %v282, 1.442695
      %v306 = vpow.pop %v305
      %v307 = vmul.f32 %v283, 1.442695
      %v308 = vpow.pop %v307
      %v309 = vmul.f32 %v284, 1.442695
      %v310 = vpow.pop %v309
      %v311 = vmul.f32 %v285, 1.442695
      %v312 = vpow.pop %v311
      %v313 = vmul.f32 %v286, 1.442695
      %v314 = vpow.pop %v313
      %v315 = vmul.f32 %v287, 1.442695
      %v316 = vpow.pop %v315
      %v317 = vmul.f32 %v288, 1.442695
      %v318 = vpow.pop %v317
      %v319 = vmul.f32 %v289, 1.442695
      %v320 = vpow.pop %v319
      %v321 = vmul.f32 %v290, 1.442695
      %v322 = vpow.pop %v321
      %v323 = vmul.f32 %v105, %v105
      %v324 = vmul.f32 %v106, %v106
      %v325 = vmul.f32 %v107, %v107
      %v326 = vmul.f32 %v108, %v108
      %v327 = vmul.f32 %v109, %v109
      %v328 = vmul.f32 %v110, %v110
      %v329 = vmul.f32 %v111, %v111
      %v330 = vmul.f32 %v112, %v112
      %v331 = vmul.f32 %v113, %v113
      %v332 = vmul.f32 %v114, %v114
      %v333 = vmul.f32 %v115, %v115
      %v334 = vmul.f32 %v116, %v116
      %v335 = vmul.f32 %v117, %v117
      %v336 = vmul.f32 %v118, %v118
      %v337 = vmul.f32 %v119, %v119
      %v338 = vmul.f32 %v120, %v120
      %v339 = vadd.f32 %v292, %v323
      %v340 = vadd.f32 %v294, %v324
      %v341 = vadd.f32 %v296, %v325
      %v342 = vadd.f32 %v298, %v326
      %v343 = vadd.f32 %v300, %v327
      %v344 = vadd.f32 %v302, %v328
      %v345 = vadd.f32 %v304, %v329
      %v346 = vadd.f32 %v306, %v330
      %v347 = vadd.f32 %v308, %v331
      %v348 = vadd.f32 %v310, %v332
      %v349 = vadd.f32 %v312, %v333
      %v350 = vadd.f32 %v314, %v334
      %v351 = vadd.f32 %v316, %v335
      %v352 = vadd.f32 %v318, %v336
      %v353 = vadd.f32 %v320, %v337
      %v354 = vadd.f32 %v322, %v338
      %v355 = vsub.f32 %v339, 1.0
      %v356 = vsub.f32 %v340, 1.0
      %v357 = vsub.f32 %v341, 1.0
      %v358 = vsub.f32 %v342, 1.0
      %v359 = vsub.f32 %v343, 1.0
      %v360 = vsub.f32 %v344, 1.0
      %v361 = vsub.f32 %v345, 1.0
      %v362 = vsub.f32 %v346, 1.0
      %v363 = vsub.f32 %v347, 1.0
      %v364 = vsub.f32 %v348, 1.0
      %v365 = vsub.f32 %v349, 1.0
      %v366 = vsub.f32 %v350, 1.0
      %v367 = vsub.f32 %v351, 1.0
      %v368 = vsub.f32 %v352, 1.0
      %v369 = vsub.f32 %v353, 1.0
      %v370 = vsub.f32 %v354, 1.0
      %v371 = vmul.f32 %v355, 0.5
      %v372 = vmul.f32 %v356, 0.5
      %v373 = vmul.f32 %v357, 0.5
      %v374 = vmul.f32 %v358, 0.5
      %v375 = vmul.f32 %v359, 0.5
      %v376 = vmul.f32 %v360, 0.5
      %v377 = vmul.f32 %v361, 0.5
      %v378 = vmul.f32 %v362, 0.5
      %v379 = vmul.f32 %v363, 0.5
      %v380 = vmul.f32 %v364, 0.5
      %v381 = vmul.f32 %v365, 0.5
      %v382 = vmul.f32 %v366, 0.5
      %v383 = vmul.f32 %v367, 0.5
      %v384 = vmul.f32 %v368, 0.5
      %v385 = vmul.f32 %v369, 0.5
      %v386 = vmul.f32 %v370, 0.5
      %v387 = vsub.f32 %v371, %v259
      %v388 = vsub.f32 %v372, %v260
      %v389 = vsub.f32 %v373, %v261
      %v390 = vsub.f32 %v374, %v262
      %v391 = vsub.f32 %v375, %v263
      %v392 = vsub.f32 %v376, %v264
      %v393 = vsub.f32 %v377, %v265
      %v394 = vsub.f32 %v378, %v266
      %v395 = vsub.f32 %v379, %v267
      %v396 = vsub.f32 %v380, %v268
      %v397 = vsub.f32 %v381, %v269
      %v398 = vsub.f32 %v382, %v270
      %v399 = vsub.f32 %v383, %v271
      %v400 = vsub.f32 %v384, %v272
      %v401 = vsub.f32 %v385, %v273
      %v402 = vsub.f32 %v386, %v274
      %v403 = vadd.f32 %v387, %v388
      %v404 = vadd.f32 %v403, %v389
      %v405 = vadd.f32 %v404, %v390
      %v406 = vadd.f32 %v405, %v391
      %v407 = vadd.f32 %v406, %v392
      %v408 = vadd.f32 %v407, %v393
      %v409 = vadd.f32 %v408, %v394
      %v410 = vadd.f32 %v409, %v395
      %v411 = vadd.f32 %v410, %v396
      %v412 = vadd.f32 %v411, %v397
      %v413 = vadd.f32 %v412, %v398
      %v414 = vadd.f32 %v413, %v399
      %v415 = vadd.f32 %v414, %v400
      %v416 = vadd.f32 %v415, %v401
      %v417 = vadd.f32 %v416, %v402
      %418 = vadd.xlane.f32.xlu0 %v417
      %v419 = vpop.xlane.xlu0 %418
      %v420 = vrot.slane %v419, 4
      %v421 = vadd.f32 %v419, %v420
      %v422 = vrot.slane %v421, 2
      %v423 = vadd.f32 %v421, %v422
      %v424 = vrot.slane %v423, 1
      %v425 = vadd.f32 %v423, %v424
      %s426 = vtos %v425
      %v427 = vld [vmem:[%s3] sm:$0x1]
      %v428 = vld [vmem:[%s4] sm:$0x1]
      %v429 = vmul.f32 %v428, 2.0
      %v430 = vmul.f32 %v429, 1.442695
      %v431 = vpow.pop %v430
      %v432 = vmul.f32 %v427, %v427
      %v433 = vadd.f32 %v431, %v432
      %v434 = vsub.f32 %v433, 1.0
      %v435 = vmul.f32 %v434, 0.5
      %v436 = vsub.f32 %v435, %v428
      %vm437 = vcmask 1040384
      %v438 = vsel %vm437, %v436, 0.0
      %439 = vadd.xlane.f32.xlu0 %v438
      %v440 = vpop.xlane.xlu0 %439
      %v441 = vrot.slane %v440, 4
      %v442 = vadd.f32 %v440, %v441
      %v443 = vrot.slane %v442, 2
      %v444 = vadd.f32 %v442, %v443
      %v445 = vrot.slane %v444, 1
      %v446 = vadd.f32 %v444, %v445
      %s447 = vtos %v446
      %s448 = sadd.f32 %s426, %s447
      %v449 = vld [vmem:[#allocation11] sm:$0xff]
      %v450 = vld [vmem:[#allocation11 + $0x8] sm:$0xff]
      %v451 = vld [vmem:[#allocation11 + $0x10] sm:$0xff]
      %v452 = vld [vmem:[#allocation11 + $0x18] sm:$0xff]
      %v453 = vld [vmem:[#allocation11 + $0x20] sm:$0xff]
      %v454 = vld [vmem:[#allocation11 + $0x28] sm:$0xff]
      %v455 = vld [vmem:[#allocation11 + $0x30] sm:$0xff]
      %v456 = vld [vmem:[#allocation11 + $0x38] sm:$0xff]
      %v457 = vld [vmem:[#allocation11 + $0x40] sm:$0xff]
      %v458 = vld [vmem:[#allocation11 + $0x48] sm:$0xff]
      %v459 = vld [vmem:[#allocation11 + $0x50] sm:$0xff]
      %v460 = vld [vmem:[#allocation11 + $0x58] sm:$0xff]
      %v461 = vld [vmem:[#allocation11 + $0x60] sm:$0xff]
      %v462 = vld [vmem:[#allocation11 + $0x68] sm:$0xff]
      %v463 = vld [vmem:[#allocation11 + $0x70] sm:$0xff]
      %v464 = vld [vmem:[#allocation11 + $0x78] sm:$0xff]
      %v465 = vmul.f32 %v449, 2.0
      %v466 = vmul.f32 %v450, 2.0
      %v467 = vmul.f32 %v451, 2.0
      %v468 = vmul.f32 %v452, 2.0
      %v469 = vmul.f32 %v453, 2.0
      %v470 = vmul.f32 %v454, 2.0
      %v471 = vmul.f32 %v455, 2.0
      %v472 = vmul.f32 %v456, 2.0
      %v473 = vmul.f32 %v457, 2.0
      %v474 = vmul.f32 %v458, 2.0
      %v475 = vmul.f32 %v459, 2.0
      %v476 = vmul.f32 %v460, 2.0
      %v477 = vmul.f32 %v461, 2.0
      %v478 = vmul.f32 %v462, 2.0
      %v479 = vmul.f32 %v463, 2.0
      %v480 = vmul.f32 %v464, 2.0
      %v481 = vmul.f32 %v465, 1.442695
      %v482 = vpow.pop %v481
      %v483 = vmul.f32 %v466, 1.442695
      %v484 = vpow.pop %v483
      %v485 = vmul.f32 %v467, 1.442695
      %v486 = vpow.pop %v485
      %v487 = vmul.f32 %v468, 1.442695
      %v488 = vpow.pop %v487
      %v489 = vmul.f32 %v469, 1.442695
      %v490 = vpow.pop %v489
      %v491 = vmul.f32 %v470, 1.442695
      %v492 = vpow.pop %v491
      %v493 = vmul.f32 %v471, 1.442695
      %v494 = vpow.pop %v493
      %v495 = vmul.f32 %v472, 1.442695
      %v496 = vpow.pop %v495
      %v497 = vmul.f32 %v473, 1.442695
      %v498 = vpow.pop %v497
      %v499 = vmul.f32 %v474, 1.442695
      %v500 = vpow.pop %v499
      %v501 = vmul.f32 %v475, 1.442695
      %v502 = vpow.pop %v501
      %v503 = vmul.f32 %v476, 1.442695
      %v504 = vpow.pop %v503
      %v505 = vmul.f32 %v477, 1.442695
      %v506 = vpow.pop %v505
      %v507 = vmul.f32 %v478, 1.442695
      %v508 = vpow.pop %v507
      %v509 = vmul.f32 %v479, 1.442695
      %v510 = vpow.pop %v509
      %v511 = vmul.f32 %v480, 1.442695
      %v512 = vpow.pop %v511
      %v513 = vmul.f32 %v121, %v121
      %v514 = vmul.f32 %v122, %v122
      %v515 = vmul.f32 %v123, %v123
      %v516 = vmul.f32 %v124, %v124
      %v517 = vmul.f32 %v125, %v125
      %v518 = vmul.f32 %v126, %v126
      %v519 = vmul.f32 %v127, %v127
      %v520 = vmul.f32 %v128, %v128
      %v521 = vmul.f32 %v129, %v129
      %v522 = vmul.f32 %v130, %v130
      %v523 = vmul.f32 %v131, %v131
      %v524 = vmul.f32 %v132, %v132
      %v525 = vmul.f32 %v133, %v133
      %v526 = vmul.f32 %v134, %v134
      %v527 = vmul.f32 %v135, %v135
      %v528 = vmul.f32 %v136, %v136
      %v529 = vadd.f32 %v482, %v513
      %v530 = vadd.f32 %v484, %v514
      %v531 = vadd.f32 %v486, %v515
      %v532 = vadd.f32 %v488, %v516
      %v533 = vadd.f32 %v490, %v517
      %v534 = vadd.f32 %v492, %v518
      %v535 = vadd.f32 %v494, %v519
      %v536 = vadd.f32 %v496, %v520
      %v537 = vadd.f32 %v498, %v521
      %v538 = vadd.f32 %v500, %v522
      %v539 = vadd.f32 %v502, %v523
      %v540 = vadd.f32 %v504, %v524
      %v541 = vadd.f32 %v506, %v525
      %v542 = vadd.f32 %v508, %v526
      %v543 = vadd.f32 %v510, %v527
      %v544 = vadd.f32 %v512, %v528
      %v545 = vsub.f32 %v529, 1.0
      %v546 = vsub.f32 %v530, 1.0
      %v547 = vsub.f32 %v531, 1.0
      %v548 = vsub.f32 %v532, 1.0
      %v549 = vsub.f32 %v533, 1.0
      %v550 = vsub.f32 %v534, 1.0
      %v551 = vsub.f32 %v535, 1.0
      %v552 = vsub.f32 %v536, 1.0
      %v553 = vsub.f32 %v537, 1.0
      %v554 = vsub.f32 %v538, 1.0
      %v555 = vsub.f32 %v539, 1.0
      %v556 = vsub.f32 %v540, 1.0
      %v557 = vsub.f32 %v541, 1.0
      %v558 = vsub.f32 %v542, 1.0
      %v559 = vsub.f32 %v543, 1.0
      %v560 = vsub.f32 %v544, 1.0
      %v561 = vmul.f32 %v545, 0.5
      %v562 = vmul.f32 %v546, 0.5
      %v563 = vmul.f32 %v547, 0.5
      %v564 = vmul.f32 %v548, 0.5
      %v565 = vmul.f32 %v549, 0.5
      %v566 = vmul.f32 %v550, 0.5
      %v567 = vmul.f32 %v551, 0.5
      %v568 = vmul.f32 %v552, 0.5
      %v569 = vmul.f32 %v553, 0.5
      %v570 = vmul.f32 %v554, 0.5
      %v571 = vmul.f32 %v555, 0.5
      %v572 = vmul.f32 %v556, 0.5
      %v573 = vmul.f32 %v557, 0.5
      %v574 = vmul.f32 %v558, 0.5
      %v575 = vmul.f32 %v559, 0.5
      %v576 = vmul.f32 %v560, 0.5
      %v577 = vsub.f32 %v561, %v449
      %v578 = vsub.f32 %v562, %v450
      %v579 = vsub.f32 %v563, %v451
      %v580 = vsub.f32 %v564, %v452
      %v581 = vsub.f32 %v565, %v453
      %v582 = vsub.f32 %v566, %v454
      %v583 = vsub.f32 %v567, %v455
      %v584 = vsub.f32 %v568, %v456
      %v585 = vsub.f32 %v569, %v457
      %v586 = vsub.f32 %v570, %v458
      %v587 = vsub.f32 %v571, %v459
      %v588 = vsub.f32 %v572, %v460
      %v589 = vsub.f32 %v573, %v461
      %v590 = vsub.f32 %v574, %v462
      %v591 = vsub.f32 %v575, %v463
      %v592 = vsub.f32 %v576, %v464
      %v593 = vadd.f32 %v577, %v578
      %v594 = vadd.f32 %v593, %v579
      %v595 = vadd.f32 %v594, %v580
      %v596 = vadd.f32 %v595, %v581
      %v597 = vadd.f32 %v596, %v582
      %v598 = vadd.f32 %v597, %v583
      %v599 = vadd.f32 %v598, %v584
      %v600 = vadd.f32 %v599, %v585
      %v601 = vadd.f32 %v600, %v586
      %v602 = vadd.f32 %v601, %v587
      %v603 = vadd.f32 %v602, %v588
      %v604 = vadd.f32 %v603, %v589
      %v605 = vadd.f32 %v604, %v590
      %v606 = vadd.f32 %v605, %v591
      %v607 = vadd.f32 %v606, %v592
      %608 = vadd.xlane.f32.xlu0 %v607
      %v609 = vpop.xlane.xlu0 %608
      %v610 = vrot.slane %v609, 4
      %v611 = vadd.f32 %v609, %v610
      %v612 = vrot.slane %v611, 2
      %v613 = vadd.f32 %v611, %v612
      %v614 = vrot.slane %v613, 1
      %v615 = vadd.f32 %v613, %v614
      %s616 = vtos %v615
      %s617 = sadd.f32 %s448, %s616
      %v618 = vld [vmem:[%s7] sm:$0x1]
      %v619 = vld [vmem:[%s8] sm:$0x1]
      %v620 = vmul.f32 %v619, 2.0
      %v621 = vmul.f32 %v620, 1.442695
      %v622 = vpow.pop %v621
      %v623 = vmul.f32 %v618, %v618
      %v624 = vadd.f32 %v622, %v623
      %v625 = vsub.f32 %v624, 1.0
      %v626 = vmul.f32 %v625, 0.5
      %v627 = vsub.f32 %v626, %v619
      %v628 = vsel %vm437, %v627, 0.0
      %629 = vadd.xlane.f32.xlu0 %v628
      %v630 = vpop.xlane.xlu0 %629
      %v631 = vrot.slane %v630, 4
      %v632 = vadd.f32 %v630, %v631
      %v633 = vrot.slane %v632, 2
      %v634 = vadd.f32 %v632, %v633
      %v635 = vrot.slane %v634, 1
      %v636 = vadd.f32 %v634, %v635
      %s637 = vtos %v636
      %s638 = sadd.f32 %s617, %s637
      %s639 = scalar_lea.smem [#allocation13], 0
      %640 = sst [smem:[%s639]] %s638
    $region61: #{tpu_custom_call.1} parent=1 // pred_fallthru
      _
    // Predicated region
    $region62: #{tpu_custom_call.1} parent=1 // pred_check
      _
    $region63: #{tpu_custom_call.1} parent=1 // pred_check_branch
      %642 = sbr.rel (0) target = $region65
    $region64: #{tpu_custom_call.1} parent=1 // pred_region
      %s644 = ssub.s32 256, 256
      %645 = vsyncadd [#allocation4], %s644
      %s646 = sshll.u32 [#allocation12], 4
      %s647 = int_to_ptr.vmem [resolvable:$true] %s646
      %652 = dma.vmem_to_hbm [thread:$0]  %s647, 256, %s9, [#allocation4], 128, 128, 8
    $region65: #{tpu_custom_call.1} parent=1 // pred_fallthru
      _
    // Predicated region
    $region66: #{tpu_custom_call.1} parent=1 // pred_check
      _
    $region67: #{tpu_custom_call.1} parent=1 // pred_check_branch
      %654 = sbr.rel (0) target = $region69
    $region68: #{tpu_custom_call.1} parent=1 // pred_region
      %s656 = ssub.s32 16, 16
      %657 = vsyncadd [#allocation5], %s656
      %660 = dma.smem_to_hbm [#allocation13], 16, %s10, [#allocation5]
    $region69: #{tpu_custom_call.1} parent=1 // pred_fallthru
      _
    // Predicated region
    $region70: #{tpu_custom_call.1} parent=1 // pred_check
      _
    $region71: #{tpu_custom_call.1} parent=1 // pred_check_branch
      %662 = sbr.rel (0) target = $region73
    $region72: #{tpu_custom_call.1} parent=1 // pred_region
      %663 = dma.done [#allocation4], 256
    $region73: #{tpu_custom_call.1} parent=1 // pred_fallthru
      _
    // Predicated region
    $region74: #{tpu_custom_call.1} parent=1 // pred_check
      _
    $region75: #{tpu_custom_call.1} parent=1 // pred_check_branch
      %665 = sbr.rel (0) target = $region77
    $region76: #{tpu_custom_call.1} parent=1 // pred_region
      %666 = dma.done [#allocation5], 16
    $region77: #{tpu_custom_call.1} parent=1 // pred_fallthru
      _
    %667 = sfence
    %668 = vsyncpa [#allocation3], 1
    %669 = vsyncpa [#allocation7], 1
    %670 = vsyncpa [#allocation10], 1
    %671 = vsyncpa [#allocation4], 1
    %672 = vsyncpa [#allocation5], 1

</llo_original>
